<compile_context>
chip_gen: v7x
topology: tpu7x:2x2x1
jax: 0.10.0
libtpu: 0.0.40
codegen_flags: <defaults>
</compile_context>

<pallas_src>
import functools
import numpy as np
import jax
import jax.numpy as jnp
from jax.experimental import pallas as pl
from jax.experimental.pallas import tpu as pltpu

_BN_EPS = 1e-5


def _round_up(x, m):
    return (x + m - 1) // m * m


def _lane_fold(M, C):
    """Fold factor f so the lane axis (C*f) becomes lane-dense (>=128)."""
    if C < 128 and 128 % C == 0 and M % (128 // C) == 0:
        return 128 // C
    return 1


def _pick_rows(Mf, Cf, target_elems=1 << 18):
    """Row-tile (multiple of 16) for streamed elementwise / reduction kernels."""
    tm = _round_up(max(1, target_elems // Cf), 16)
    return min(_round_up(Mf, 16), tm)


def _pick_tile(dim, candidates=(512, 256, 128)):
    d = _round_up(dim, 128)
    for c in candidates:
        if d % c == 0:
            return c
    return 128


# ----------------------------- matmul kernel --------------------------------

def _matmul_kernel(a_ref, b_ref, o_ref, acc_ref):
    @pl.when(pl.program_id(2) == 0)
    def _():
        acc_ref[...] = jnp.zeros_like(acc_ref)

    acc_ref[...] += jnp.dot(a_ref[...], b_ref[...],
                            preferred_element_type=jnp.float32)

    @pl.when(pl.program_id(2) == pl.num_programs(2) - 1)
    def _():
        o_ref[...] = acc_ref[...].astype(o_ref.dtype)


def pallas_matmul(a, b, out_dtype=jnp.bfloat16):
    """(M, K) @ (K, N) -> (M, N); bf16 MXU inputs, f32 accumulation."""
    M, K = a.shape
    K2, N = b.shape
    assert K == K2
    a = a.astype(jnp.bfloat16)
    b = b.astype(jnp.bfloat16)
    tm = min(256, _round_up(M, 16))
    tk = _pick_tile(K)
    tn = _pick_tile(N)
    Mp, Kp, Np = _round_up(M, tm), _round_up(K, tk), _round_up(N, tn)
    if (Mp, Kp) != (M, K):
        a = jnp.pad(a, ((0, Mp - M), (0, Kp - K)))
    if (Kp, Np) != (K, N):
        b = jnp.pad(b, ((0, Kp - K), (0, Np - N)))
    out = pl.pallas_call(
        _matmul_kernel,
        out_shape=jax.ShapeDtypeStruct((Mp, Np), out_dtype),
        grid_spec=pltpu.PrefetchScalarGridSpec(
            num_scalar_prefetch=0,
            grid=(Mp // tm, Np // tn, Kp // tk),
            in_specs=[pl.BlockSpec((tm, tk), lambda i, j, k: (i, k)),
                      pl.BlockSpec((tk, tn), lambda i, j, k: (k, j))],
            out_specs=pl.BlockSpec((tm, tn), lambda i, j, k: (i, j)),
            scratch_shapes=[pltpu.VMEM((tm, tn), jnp.float32)]),
        compiler_params=pltpu.CompilerParams(
            dimension_semantics=("parallel", "parallel", "arbitrary"),
            vmem_limit_bytes=32 * 1024 * 1024),
    )(a, b)
    if (Mp, Np) != (M, N):
        out = out[:M, :N]
    return out


# --------------------------- BatchNorm kernels -------------------------------

def _bn_stats_kernel(x_ref, s_ref, q_ref):
    @pl.when(pl.program_id(0) == 0)
    def _():
        s_ref[...] = jnp.zeros_like(s_ref)
        q_ref[...] = jnp.zeros_like(q_ref)
    x = x_ref[...].astype(jnp.float32)
    s_ref[...] += jnp.sum(x, axis=0, keepdims=True)
    q_ref[...] += jnp.sum(x * x, axis=0, keepdims=True)


def _bn_apply_kernel(x_ref, sc_ref, sh_ref, o_ref, *, relu):
    y = x_ref[...].astype(jnp.float32) * sc_ref[...] + sh_ref[...]
    if relu:
        y = jnp.maximum(y, 0.0)
    o_ref[...] = y.astype(o_ref.dtype)


def _bn_apply_res_kernel(x_ref, r_ref, sc_ref, sh_ref, o_ref):
    y = x_ref[...].astype(jnp.float32) * sc_ref[...] + sh_ref[...]
    y = y + r_ref[...].astype(jnp.float32)
    o_ref[...] = jnp.maximum(y, 0.0).astype(o_ref.dtype)


def pallas_bn(x2d, gamma, beta, *, relu, residual=None):
    """Training-mode BatchNorm over rows of (M, C) [+ residual] [+ ReLU], tiled over M."""
    M, C = x2d.shape
    f = _lane_fold(M, C)
    Mf, Cf = M // f, C * f
    xf = x2d.reshape(Mf, Cf)
    resf = residual.reshape(Mf, Cf) if residual is not None else None
    tm = _pick_rows(Mf, Cf)
    Mp = _round_up(Mf, tm)
    if Mp != Mf:  # zero-padded rows do not perturb the sums; divide by true M
        xf = jnp.pad(xf, ((0, Mp - Mf), (0, 0)))
        if resf is not None:
            resf = jnp.pad(resf, ((0, Mp - Mf), (0, 0)))

    row_spec = pl.BlockSpec((tm, Cf), lambda i: (i, 0))
    vec_spec = pl.BlockSpec((1, Cf), lambda i: (0, 0))

    # pass 1: streamed global per-channel sum / sum-of-squares
    s, q = pl.pallas_call(
        _bn_stats_kernel,
        out_shape=(jax.ShapeDtypeStruct((1, Cf), jnp.float32),
                   jax.ShapeDtypeStruct((1, Cf), jnp.float32)),
        grid_spec=pltpu.PrefetchScalarGridSpec(
            num_scalar_prefetch=0, grid=(Mp // tm,),
            in_specs=[row_spec],
            out_specs=(vec_spec, vec_spec)),
        compiler_params=pltpu.CompilerParams(
            dimension_semantics=("arbitrary",)),
    )(xf)

    ch_sum = s.reshape(f, C).sum(axis=0)
    ch_sq = q.reshape(f, C).sum(axis=0)
    mean = ch_sum / M
    var = jnp.maximum(ch_sq / M - mean * mean, 0.0)
    scale = gamma * jax.lax.rsqrt(var + _BN_EPS)
    shift = beta - mean * scale
    scale_f = jnp.tile(scale, f).reshape(1, Cf)
    shift_f = jnp.tile(shift, f).reshape(1, Cf)

    # pass 2: streamed normalize (+ residual) (+ ReLU)
    if resf is None:
        kern = functools.partial(_bn_apply_kernel, relu=relu)
        operands = (xf, scale_f, shift_f)
        in_specs = [row_spec, vec_spec, vec_spec]
    else:
        kern = _bn_apply_res_kernel
        operands = (xf, resf, scale_f, shift_f)
        in_specs = [row_spec, row_spec, vec_spec, vec_spec]
    y = pl.pallas_call(
        kern,
        out_shape=jax.ShapeDtypeStruct((Mp, Cf), jnp.bfloat16),
        grid_spec=pltpu.PrefetchScalarGridSpec(
            num_scalar_prefetch=0, grid=(Mp // tm,),
            in_specs=in_specs,
            out_specs=row_spec),
        compiler_params=pltpu.CompilerParams(
            dimension_semantics=("parallel",)),
    )(*operands)
    if Mp != Mf:
        y = y[:Mf]
    return y.reshape(M, C)


# --------------------------- pooling / linear --------------------------------

def _max_kernel(x_ref, o_ref):
    o_ref[...] = jnp.max(x_ref[...], axis=0)


def maxpool_3x3_s2_p1(x):
    N, H, W, C = x.shape
    Ho = (H + 2 - 3) // 2 + 1
    Wo = (W + 2 - 3) // 2 + 1
    xp = jnp.pad(x, ((0, 0), (1, 1), (1, 1), (0, 0)),
                 constant_values=-jnp.inf)
    # TODO(synk): the 9 shifted taps are still materialized in HBM; a fully
    # fused window read via index_map offsets would cut this traffic further.
    wins = [xp[:, ki:ki + 2 * Ho:2, kj:kj + 2 * Wo:2, :]
            for ki in range(3) for kj in range(3)]
    M = N * Ho * Wo
    f = _lane_fold(M, C)
    Mf, Cf = M // f, C * f
    stacked = jnp.stack(wins, axis=0).reshape(9, Mf, Cf)
    tm = _pick_rows(Mf, Cf, target_elems=1 << 16)
    Mp = _round_up(Mf, tm)
    if Mp != Mf:
        stacked = jnp.pad(stacked, ((0, 0), (0, Mp - Mf), (0, 0)))
    out = pl.pallas_call(
        _max_kernel,
        out_shape=jax.ShapeDtypeStruct((Mp, Cf), x.dtype),
        grid_spec=pltpu.PrefetchScalarGridSpec(
            num_scalar_prefetch=0, grid=(Mp // tm,),
            in_specs=[pl.BlockSpec((9, tm, Cf), lambda i: (0, i, 0))],
            out_specs=pl.BlockSpec((tm, Cf), lambda i: (i, 0))),
        compiler_params=pltpu.CompilerParams(
            dimension_semantics=("parallel",)),
    )(stacked)
    if Mp != Mf:
        out = out[:Mf]
    return out.reshape(N, Ho, Wo, C)


def _mean_kernel(x_ref, o_ref):
    o_ref[...] = jnp.mean(x_ref[...].astype(jnp.float32), axis=1)


def global_avgpool(x):
    N, H, W, C = x.shape
    return pl.pallas_call(
        _mean_kernel,
        out_shape=jax.ShapeDtypeStruct((N, C), jnp.float32),
    )(x.reshape(N, H * W, C))


def _linear_kernel(x_ref, w_ref, b_ref, o_ref):
    o_ref[...] = (jnp.dot(x_ref[...], w_ref[...],
                          preferred_element_type=jnp.float32) + b_ref[...])


def linear(x, w, b, n_out):
    out = pl.pallas_call(
        _linear_kernel,
        out_shape=jax.ShapeDtypeStruct((x.shape[0], w.shape[1]), jnp.float32),
    )(x.astype(jnp.bfloat16), w, b)
    return out[:, :n_out]


# --------------------------- layer-level wrappers ----------------------------

def _im2col(x, kh, kw, stride, pad):
    N, H, W, Cin = x.shape
    Ho = (H + 2 * pad - kh) // stride + 1
    Wo = (W + 2 * pad - kw) // stride + 1
    if kh == 1 and kw == 1 and pad == 0:
        xs = x[:, ::stride, ::stride, :]
        return xs.reshape(N * Ho * Wo, Cin), Ho, Wo
    # TODO(synk): 3x3/7x7 taps are materialized via im2col (bf16) instead of
    # being folded into the matmul reduction grid with shifted-window reads.
    xp = jnp.pad(x, ((0, 0), (pad, pad), (pad, pad), (0, 0)))
    cols = []
    for ki in range(kh):
        for kj in range(kw):
            cols.append(xp[:, ki:ki + stride * Ho:stride,
                           kj:kj + stride * Wo:stride, :])
    patches = jnp.stack(cols, axis=3)  # (N, Ho, Wo, kh*kw, Cin)
    return patches.reshape(N * Ho * Wo, kh * kw * Cin), Ho, Wo


def conv_bn(x, w, gamma, beta, *, stride, pad, relu=True, residual=None):
    """conv (no bias) + BatchNorm(train) [+ residual] [+ ReLU]. x NHWC bf16, w HWIO bf16."""
    N = x.shape[0]
    kh, kw, cin, cout = w.shape
    patches, Ho, Wo = _im2col(x, kh, kw, stride, pad)
    y = pallas_matmul(patches, w.reshape(kh * kw * cin, cout))
    res2d = residual.reshape(-1, cout) if residual is not None else None
    y = pallas_bn(y, gamma, beta, relu=relu, residual=res2d)
    return y.reshape(N, Ho, Wo, cout)


def bottleneck(x, p, stride):
    identity = x
    out = conv_bn(x, p['w1'], p['g1'], p['b1'], stride=1, pad=0, relu=True)
    out = conv_bn(out, p['w2'], p['g2'], p['b2'], stride=stride, pad=1, relu=True)
    if 'wd' in p:  # downsample path (1x1 conv + BN, no ReLU)
        identity = conv_bn(x, p['wd'], p['gd'], p['bd'],
                           stride=stride, pad=0, relu=False)
    out = conv_bn(out, p['w3'], p['g3'], p['b3'],
                  stride=1, pad=0, residual=identity)
    return out


# ------------------------------- parameters ----------------------------------

_LAYER_CFG = [(64, 3, 1), (128, 4, 2), (256, 6, 2), (512, 3, 2)]  # ResNet-50


def make_params(key, n_in_layers, n_out_classes):
    # TODO(synk): pretrained torchvision checkpoint loading is not reproduced;
    # weights are deterministic synthetic values instead.
    keys = iter(jax.random.split(key, 64))

    def conv_w(kh, kw, cin, cout):
        fan_in = kh * kw * cin
        return (jax.random.normal(next(keys), (kh, kw, cin, cout), jnp.float32)
                / np.sqrt(fan_in)).astype(jnp.bfloat16)

    ones = lambda c: jnp.ones((c,), jnp.float32)
    zeros = lambda c: jnp.zeros((c,), jnp.float32)

    params = {'stem': dict(w=conv_w(7, 7, n_in_layers, 64),
                           g=ones(64), b=zeros(64))}
    layers = []
    inplanes = 64
    for planes, nblocks, _stride in _LAYER_CFG:
        blocks = []
        for bi in range(nblocks):
            p = dict(w1=conv_w(1, 1, inplanes, planes),
                     g1=ones(planes), b1=zeros(planes),
                     w2=conv_w(3, 3, planes, planes),
                     g2=ones(planes), b2=zeros(planes),
                     w3=conv_w(1, 1, planes, planes * 4),
                     g3=ones(planes * 4), b3=zeros(planes * 4))
            if bi == 0:
                p['wd'] = conv_w(1, 1, inplanes, planes * 4)
                p['gd'] = ones(planes * 4)
                p['bd'] = zeros(planes * 4)
            blocks.append(p)
            inplanes = planes * 4
        layers.append(blocks)
    params['layers'] = layers

    ncls_p = _round_up(n_out_classes, 128)
    fc_w = (jax.random.normal(next(keys), (2048, n_out_classes), jnp.float32)
            / np.sqrt(2048.0))
    params['fc_w'] = jnp.pad(fc_w, ((0, 0), (0, ncls_p - n_out_classes))
                             ).astype(jnp.bfloat16)
    params['fc_b'] = jnp.zeros((1, ncls_p), jnp.float32)
    params['n_out'] = n_out_classes
    return params


# -------------------------------- forward ------------------------------------

def resnet_base_forward(params, x_nchw):
    """Returns (fc_output [N, n_classes], conv_output [N, 1024, H/16, W/16])."""
    x = jnp.transpose(x_nchw, (0, 2, 3, 1)).astype(jnp.bfloat16)  # NCHW -> NHWC
    st = params['stem']
    x = conv_bn(x, st['w'], st['g'], st['b'], stride=2, pad=3, relu=True)
    x = maxpool_3x3_s2_p1(x)

    conv_output = None
    for li, blocks in enumerate(params['layers']):
        layer_stride = _LAYER_CFG[li][2]
        for bi, p in enumerate(blocks):
            s = layer_stride if bi == 0 else 1
            x = bottleneck(x, p, s)
        if li == 2:  # after layer3
            conv_output = x

    pooled = global_avgpool(x)                                   # (N, 2048) f32
    logits = linear(pooled, params['fc_w'], params['fc_b'], params['n_out'])
    conv_out = jnp.transpose(conv_output.astype(jnp.float32), (0, 3, 1, 2))
    return logits, conv_out


# ---------------------------------- main --------------------------------------

if __name__ == "__main__":
    n_in_layers = 4       # != 3 -> custom conv1, as in the module
    n_out_classes = 10
    N, H, W = 2, 64, 64   # small but non-degenerate for a 32x-downsampling net

    key = jax.random.PRNGKey(0)
    pkey, xkey = jax.random.split(key)
    params = make_params(pkey, n_in_layers, n_out_classes)
    x = jax.random.normal(xkey, (N, n_in_layers, H, W), jnp.float32)  # NCHW

    logits, conv_out = resnet_base_forward(params, x)
    logits = jax.block_until_ready(logits)
    conv_out = jax.block_until_ready(conv_out)

    assert logits.shape == (N, n_out_classes)
    assert conv_out.shape == (N, 1024, H // 16, W // 16)
    assert bool(jnp.all(jnp.isfinite(logits))) and bool(jnp.all(jnp.isfinite(conv_out)))
    print("KERNEL_OK")
</pallas_src>

<mosaic_0001>
module attributes {stable_mosaic.version = 11 : i64} {
  func.func @_matmul_kernel(%arg0: i32, %arg1: i32, %arg2: i32, %arg3: memref<256x256xbf16, #tpu.memory_space<vmem>>, %arg4: memref<256x128xbf16, #tpu.memory_space<vmem>>, %arg5: memref<256x128xbf16, #tpu.memory_space<vmem>>, %arg6: memref<256x128xf32, #tpu.memory_space<vmem>>) attributes {dimension_semantics = [#tpu.dimension_semantics<parallel>, #tpu.dimension_semantics<parallel>, #tpu.dimension_semantics<arbitrary>], iteration_bounds = array<i64: 8, 1, 1>, scalar_prefetch = 0 : i64, scratch_operands = 1 : i64, tpu.core_type = #tpu.core_type<tc>, window_params = [{transform_indices = @transform_0, window_bounds = array<i64: 256, 256>}, {transform_indices = @transform_1, window_bounds = array<i64: 256, 128>}, {transform_indices = @transform_2, window_bounds = array<i64: 256, 128>}]} {
    %c0_i32 = arith.constant 0 : i32
    %0 = arith.cmpi eq, %arg2, %c0_i32 : i32
    %1 = arith.extui %0 : i1 to i32
    %c0_i32_0 = arith.constant 0 : i32
    %2 = arith.cmpi ne, %1, %c0_i32_0 : i32
    scf.if %2 {
      %cst_10 = arith.constant 0.000000e+00 : f32
      %12 = vector.broadcast %cst_10 : f32 to vector<256x128xf32>
      %c0_11 = arith.constant 0 : index
      %c0_12 = arith.constant 0 : index
      %13 = vector.load %arg6[%c0_11, %c0_12] : memref<256x128xf32, #tpu.memory_space<vmem>>, vector<256x128xf32>
      tpu.vector_store %arg6[%c0_11, %c0_12], %12 {strides = array<i32>} : memref<256x128xf32, #tpu.memory_space<vmem>>, vector<256x128xf32>,
    } else {
    }
    %c0 = arith.constant 0 : index
    %c0_1 = arith.constant 0 : index
    %3 = vector.load %arg6[%c0, %c0_1] : memref<256x128xf32, #tpu.memory_space<vmem>>, vector<256x128xf32>
    %c0_2 = arith.constant 0 : index
    %c0_3 = arith.constant 0 : index
    %4 = vector.load %arg3[%c0_2, %c0_3] : memref<256x256xbf16, #tpu.memory_space<vmem>>, vector<256x256xbf16>
    %c0_4 = arith.constant 0 : index
    %c0_5 = arith.constant 0 : index
    %5 = vector.load %arg4[%c0_4, %c0_5] : memref<256x128xbf16, #tpu.memory_space<vmem>>, vector<256x128xbf16>
    %cst = arith.constant dense<0.000000e+00> : vector<256x128xf32>
    %6 = tpu.matmul %4, %5, %cst {dimension_numbers = #tpu.dot_dimension_numbers<[1], [0], [0], [1], [0, 0, 1, 1], [], []>} : vector<256x256xbf16>, vector<256x128xbf16>, vector<256x128xf32> -> vector<256x128xf32>
    %7 = arith.addf %3, %6 : vector<256x128xf32>
    %c0_6 = arith.constant 0 : index
    %c0_7 = arith.constant 0 : index
    %8 = vector.load %arg6[%c0_6, %c0_7] : memref<256x128xf32, #tpu.memory_space<vmem>>, vector<256x128xf32>
    tpu.vector_store %arg6[%c0_6, %c0_7], %7 {strides = array<i32>} : memref<256x128xf32, #tpu.memory_space<vmem>>, vector<256x128xf32>,
    %c0_i32_8 = arith.constant 0 : i32
    %9 = arith.cmpi eq, %arg2, %c0_i32_8 : i32
    %10 = arith.extui %9 : i1 to i32
    %c0_i32_9 = arith.constant 0 : i32
    %11 = arith.cmpi ne, %10, %c0_i32_9 : i32
    scf.if %11 {
      %c0_10 = arith.constant 0 : index
      %c0_11 = arith.constant 0 : index
      %12 = vector.load %arg6[%c0_10, %c0_11] : memref<256x128xf32, #tpu.memory_space<vmem>>, vector<256x128xf32>
      %13 = arith.truncf %12 : vector<256x128xf32> to vector<256x128xbf16>
      %c0_12 = arith.constant 0 : index
      %c0_13 = arith.constant 0 : index
      %14 = vector.load %arg5[%c0_12, %c0_13] : memref<256x128xbf16, #tpu.memory_space<vmem>>, vector<256x128xbf16>
      tpu.vector_store %arg5[%c0_12, %c0_13], %13 {strides = array<i32>} : memref<256x128xbf16, #tpu.memory_space<vmem>>, vector<256x128xbf16>,
    } else {
    }
    return
  }
  func.func @transform_0(%arg0: i32, %arg1: i32, %arg2: i32) -> (i32, i32) {
    %c0_i32 = arith.constant 0 : i32
    return %arg0, %arg2 : i32, i32
  }
  func.func @transform_1(%arg0: i32, %arg1: i32, %arg2: i32) -> (i32, i32) {
    %c0_i32 = arith.constant 0 : i32
    return %arg2, %arg1 : i32, i32
  }
  func.func @transform_2(%arg0: i32, %arg1: i32, %arg2: i32) -> (i32, i32) {
    %c0_i32 = arith.constant 0 : i32
    return %arg0, %arg1 : i32, i32
  }
}

</mosaic_0001>

<llo_original>
// kernel: tpu_custom_call.1
$region0: #{tpu_custom_call.1}
  #allocation0 [shape = 'u32[]', space=smem, size = 0x4, offset = 0x4, fixed_abs, tag = 'smem constant byte address 0x4 - core index']
  #allocation1 [shape = 'u32[144,128]{1,0:T(1,128)}', space=vmem, size = 0x12000, scoped, tag = 'internal scratch']
  #allocation2 [shape = 'f32[256,128]{1,0:T(8,128)}', space=vmem, size = 0x20000, scoped, tag = 'scratch operand']
  %s0 = inlined_call_operand.hbm [shape: bf16[2048,256], index: 0, kind: input, shape index: {}]
  %s1 = inlined_call_operand.hbm [shape: bf16[256,128], index: 1, kind: input, shape index: {}]
  %s2 = inlined_call_operand.hbm [shape: bf16[2048,128], index: 2, kind: output, shape index: {}]
  %s3 = sld [smem:[#allocation0]]
  $region57: #{tpu_custom_call.1} parent=0
    _
  %s5 = ssub.s32 1, %s3
  %s6 = scalar_select 0, %s5, %s3
  $region1: #{tpu_custom_call.1} parent=0
    #allocation3 [shape = 'u8[262144]{0}', space=vmem, size = 0x40000, scoped, tag = 'input window, operand 0']
    #allocation4 [shape = 's32[2]{0}', space=sflag, size = 0x8, scoped, tag = 'scoped memory for tpu_custom_call.1']
    #allocation5 [shape = 's32[2]{0}', space=sflag, size = 0x8, scoped, tag = 'scoped memory for tpu_custom_call.1']
    #allocation6 [shape = 'u8[65536]{0}', space=vmem, size = 0x10000, scoped, tag = 'input window, operand 1, single buffered']
    #allocation7 [shape = 's32[1]{0}', space=sflag, size = 0x4, scoped, tag = 'scoped memory for tpu_custom_call.1']
    #allocation8 [shape = 'u8[131072]{0}', space=vmem, size = 0x20000, scoped, tag = 'output window, operand 0']
    %7 = vsyncpa [#allocation4], 0
    %s8 = scalar_lea.sflag [#allocation4], 1
    %9 = vsyncpa %s8, 0
    %10 = vsyncpa [#allocation7], 0
    %11 = vsyncpa [#allocation5], 0
    %s12 = scalar_lea.sflag [#allocation5], 1
    %13 = vsyncpa %s12, 0
    loop: start=0, step=1, limit=10
    $region2: #{tpu_custom_call.1} parent=1 // loop_pre_header
      _
    $region3: #{tpu_custom_call.1} parent=1 // loop_header
      %s15 = sphi 0, %s19
      %p16 = scmp.ge.s32.totalorder %s15, 10
      %s22 = sphi 0, %s41
      %s23 = sphi 0, %s37
      %s24 = sphi 0, %s33
      %s25 = sphi 0, %s22
      %s26 = sphi 0, %s23
      %s27 = sphi 0, %s24
      %s28 = sphi 0, %s25
      %s29 = sphi 0, %s26
      %s30 = sphi 0, %s27
      %s46 = sphi 0, %s48
      %s49 = sphi 0, %s46
      %s50 = sphi 0, %s49
      %s66 = sphi 0, %s50
      %s74 = sphi 0, %s76
      %s77 = sphi 0, %s74
      %s78 = sphi 0, %s77
      %s94 = sphi 0, %s78
      %s102 = sphi 0, %s104
      %s105 = sphi 0, %s102
      %s106 = sphi 0, %s105
      %s122 = sphi 0, %s106
    $region4: #{tpu_custom_call.1} parent=1 // loop_header_branch
      %18 = sbr.rel (%p16) target = $region8
    $region5: #{tpu_custom_call.1} parent=1 // loop_body
      %s20 = ssub.s32 %s15, 1
      %s21 = ssub.s32 %s15, 2
      %s31 = sadd.s32 1, %s24
      %p32 = scmp.ge.s32.totalorder %s31, 1
      %s33 = scalar_select %p32, 0, %s31
      %s34 = sadd.s32 1, %s23
      %s35 = scalar_select %p32, %s34, %s23
      %p36 = scmp.ge.s32.totalorder %s35, 1
      %s37 = scalar_select %p36, 0, %s35
      %s38 = sadd.s32 1, %s22
      %s39 = scalar_select %p36, %s38, %s22
      %p40 = scmp.ge.s32.totalorder %s39, 8
      %s41 = scalar_select %p40, 0, %s39
      %s42 = ssub.s32 %s22, %s41
      %s43 = ssub.s32 %s24, %s33
      %s44 = sor.u32 %s42, %s43
      %p45 = scmp.eq.s32.totalorder %s44, 0
      %s47 = sadd.s32 %s46, 1
      %s48 = scalar_select %p45, %s46, %s47
      %p51 = pneg %p45
      %p52 = scmp.eq.s32.totalorder %s15, 7
      %p53 = por %p51, %p52
      %p54 = scmp.ne.s32.totalorder %s46, %s49
      %p55 = scmp.eq.s32.totalorder %s15, 0
      %p56 = por %p54, %p55
      %p57 = scmp.ne.s32.totalorder %s46, %s49
      %p58 = scmp.eq.s32.totalorder %s20, 7
      %p59 = por %p57, %p58
      %p60 = scmp.ne.s32.totalorder %s49, %s50
      %p61 = scmp.eq.s32.totalorder %s20, 0
      %p62 = por %p60, %p61
      %p63 = scmp.ne.s32.totalorder %s49, %s50
      %p64 = scmp.eq.s32.totalorder %s21, 7
      %p65 = por %p63, %p64
      %p67 = scmp.ne.s32.totalorder %s50, %s66
      %p68 = scmp.eq.s32.totalorder %s21, 0
      %p69 = por %p67, %p68
      %s70 = ssub.s32 %s24, %s33
      %s71 = ssub.s32 %s23, %s37
      %s72 = sor.u32 %s70, %s71
      %p73 = scmp.eq.s32.totalorder %s72, 0
      %s75 = sadd.s32 %s74, 1
      %s76 = scalar_select %p73, %s74, %s75
      %p79 = pneg %p73
      %p80 = scmp.eq.s32.totalorder %s15, 7
      %p81 = por %p79, %p80
      %p82 = scmp.ne.s32.totalorder %s74, %s77
      %p83 = scmp.eq.s32.totalorder %s15, 0
      %p84 = por %p82, %p83
      %p85 = scmp.ne.s32.totalorder %s74, %s77
      %p86 = scmp.eq.s32.totalorder %s20, 7
      %p87 = por %p85, %p86
      %p88 = scmp.ne.s32.totalorder %s77, %s78
      %p89 = scmp.eq.s32.totalorder %s20, 0
      %p90 = por %p88, %p89
      %p91 = scmp.ne.s32.totalorder %s77, %s78
      %p92 = scmp.eq.s32.totalorder %s21, 7
      %p93 = por %p91, %p92
      %p95 = scmp.ne.s32.totalorder %s78, %s94
      %p96 = scmp.eq.s32.totalorder %s21, 0
      %p97 = por %p95, %p96
      %s98 = ssub.s32 %s22, %s41
      %s99 = ssub.s32 %s23, %s37
      %s100 = sor.u32 %s98, %s99
      %p101 = scmp.eq.s32.totalorder %s100, 0
      %s103 = sadd.s32 %s102, 1
      %s104 = scalar_select %p101, %s102, %s103
      %p107 = pneg %p101
      %p108 = scmp.eq.s32.totalorder %s15, 7
      %p109 = por %p107, %p108
      %p110 = scmp.ne.s32.totalorder %s102, %s105
      %p111 = scmp.eq.s32.totalorder %s15, 0
      %p112 = por %p110, %p111
      %p113 = scmp.ne.s32.totalorder %s102, %s105
      %p114 = scmp.eq.s32.totalorder %s20, 7
      %p115 = por %p113, %p114
      %p116 = scmp.ne.s32.totalorder %s105, %s106
      %p117 = scmp.eq.s32.totalorder %s20, 0
      %p118 = por %p116, %p117
      %p119 = scmp.ne.s32.totalorder %s105, %s106
      %p120 = scmp.eq.s32.totalorder %s21, 7
      %p121 = por %p119, %p120
      %p123 = scmp.ne.s32.totalorder %s106, %s122
      %p124 = scmp.eq.s32.totalorder %s21, 0
      %p125 = por %p123, %p124
      %p126 = scmp.le.s32.totalorder 1, %s15
      %p127 = scmp.lt.s32.totalorder %s15, 9
      %p128 = pnand %p126, %p127
      %p129 = pneg %p128
      // Predicated region
      $region9: #{tpu_custom_call.1} parent=5 // pred_check
        _
      $region10: #{tpu_custom_call.1} parent=5 // pred_check_branch
        %131 = sbr.rel (%p128) target = $region12
      $region11: #{tpu_custom_call.1} parent=5 // pred_region
        %s132 = ssub.s32 %s15, 1
        // Predicated region
        $region13: #{tpu_custom_call.1} parent=11 // pred_check
          %p133 = pneg %p90
        $region14: #{tpu_custom_call.1} parent=11 // pred_check_branch
          %135 = sbr.rel (%p133) target = $region16
        $region15: #{tpu_custom_call.1} parent=11 // pred_region
          %s136 = smul.u32 32, %s27
          %s138 = ssub.s32 2048, 2048
          %139 = vsyncadd [#allocation7], %s138
          %s140 = sadd.s32 %s26, %s136
          %s141 = smul.addr %s140, 64
          %s142 = scalar_lea.hbm %s1, %s141
          %s143 = sshll.u32 [#allocation6], 4
          %s144 = int_to_ptr.vmem [resolvable:$true] %s143
          %149 = dma.hbm_to_vmem [thread:$0]  %s142, 2048, %s144, [#allocation7], 64, 64, 4
        $region16: #{tpu_custom_call.1} parent=11 // pred_fallthru
          _
      $region12: #{tpu_custom_call.1} parent=5 // pred_fallthru
        _
      %p150 = scmp.lt.s32.totalorder %s15, 8
      // Predicated region
      $region17: #{tpu_custom_call.1} parent=5 // pred_check
        %p151 = pneg %p150
      $region18: #{tpu_custom_call.1} parent=5 // pred_check_branch
        %153 = sbr.rel (%p151) target = $region20
      $region19: #{tpu_custom_call.1} parent=5 // pred_region
        // Predicated region
        $region21: #{tpu_custom_call.1} parent=19 // pred_check
          %p154 = pneg %p56
        $region22: #{tpu_custom_call.1} parent=19 // pred_check_branch
          %156 = sbr.rel (%p154) target = $region24
        $region23: #{tpu_custom_call.1} parent=19 // pred_region
          %s157 = sand.u32 %s46, 1
          %s158 = scalar_lea.sflag [#allocation4], %s157
          %s159 = sand.u32 %s46, 1
          %s160 = smul.addr %s159, 256
          %s161 = scalar_lea.vmem [#allocation3], %s160
          %s162 = smul.u32 32, %s22
          %s163 = smul.u32 2, %s24
          %s165 = ssub.s32 4096, 4096
          %166 = vsyncadd %s158, %s165
          %s167 = smul.addr %s162, 2
          %s168 = sadd.s32 %s163, %s167
          %s169 = smul.addr %s168, 64
          %s170 = scalar_lea.hbm %s0, %s169
          %s171 = sshll.u32 %s161, 4
          %s172 = int_to_ptr.vmem [resolvable:$true] %s171
          %177 = dma.hbm_to_vmem [thread:$0]  %s170, 4096, %s172, %s158, 128, 128, 8
        $region24: #{tpu_custom_call.1} parent=19 // pred_fallthru
          _
      $region20: #{tpu_custom_call.1} parent=5 // pred_fallthru
        _
      %p178 = scmp.le.s32.totalorder 1, %s15
      %p179 = scmp.lt.s32.totalorder %s15, 9
      %p180 = pnand %p178, %p179
      %p181 = pneg %p180
      // Predicated region
      $region25: #{tpu_custom_call.1} parent=5 // pred_check
        _
      $region26: #{tpu_custom_call.1} parent=5 // pred_check_branch
        %183 = sbr.rel (%p180) target = $region28
      $region27: #{tpu_custom_call.1} parent=5 // pred_region
        %s184 = ssub.s32 %s15, 1
        %s185 = sand.u32 %s49, 1
        %s186 = scalar_lea.sflag [#allocation4], %s185
        %s187 = sand.u32 %s49, 1
        %s188 = smul.addr %s187, 256
        %s189 = scalar_lea.vmem [#allocation3], %s188
        // Predicated region
        $region29: #{tpu_custom_call.1} parent=27 // pred_check
          %p190 = pneg %p62
        $region30: #{tpu_custom_call.1} parent=27 // pred_check_branch
          %192 = sbr.rel (%p190) target = $region32
        $region31: #{tpu_custom_call.1} parent=27 // pred_region
          %193 = dma.done %s186, 4096
        $region32: #{tpu_custom_call.1} parent=27 // pred_fallthru
          _
        // Predicated region
        $region33: #{tpu_custom_call.1} parent=27 // pred_check
          %p194 = pneg %p90
        $region34: #{tpu_custom_call.1} parent=27 // pred_check_branch
          %196 = sbr.rel (%p194) target = $region36
        $region35: #{tpu_custom_call.1} parent=27 // pred_region
          %197 = dma.done [#allocation7], 2048
        $region36: #{tpu_custom_call.1} parent=27 // pred_fallthru
          _
        %s198 = sand.u32 %s49, 1
        %s199 = scalar_lea.sflag [#allocation4], %s198
        %s200 = sand.u32 %s49, 1
        %s201 = smul.addr %s200, 256
        %s202 = scalar_lea.vmem [#allocation3], %s201
        %p203 = pneg %p62
        %p204 = pneg %p59
        %p205 = pneg %p90
        %p206 = pneg %p87
        %p207 = pneg %p118
        %p208 = pneg %p115
        %s209 = sand.u32 %s105, 1
        %s210 = scalar_lea.sflag [#allocation5], %s209
        %s211 = sand.u32 %s105, 1
        %s212 = smul.addr %s211, 128
        %s213 = scalar_lea.vmem [#allocation8], %s212
        %s214 = smul.u32 32, %s25
        %s215 = smul.u32 2, %s27
        %s216 = smul.u32 32, %s27
        %s217 = smul.u32 32, %s25
        %p219 = scmp.eq.s32.totalorder %s27, 0
        // Predicated region
        $region37: #{tpu_custom_call.1} parent=27 // pred_check
          %p220 = pneg %p219
        $region38: #{tpu_custom_call.1} parent=27 // pred_check_branch
          %222 = sbr.rel (%p220) target = $region40
        $region39: #{tpu_custom_call.1} parent=27 // pred_region
          %223 = vst [vmem:[#allocation2] sm:$0xff] 0.0
          %224 = vst [vmem:[#allocation2 + $0x8] sm:$0xff] 0.0
          %225 = vst [vmem:[#allocation2 + $0x10] sm:$0xff] 0.0
          %226 = vst [vmem:[#allocation2 + $0x18] sm:$0xff] 0.0
          %227 = vst [vmem:[#allocation2 + $0x20] sm:$0xff] 0.0
          %228 = vst [vmem:[#allocation2 + $0x28] sm:$0xff] 0.0
          %229 = vst [vmem:[#allocation2 + $0x30] sm:$0xff] 0.0
          %230 = vst [vmem:[#allocation2 + $0x38] sm:$0xff] 0.0
          %231 = vst [vmem:[#allocation2 + $0x40] sm:$0xff] 0.0
          %232 = vst [vmem:[#allocation2 + $0x48] sm:$0xff] 0.0
          %233 = vst [vmem:[#allocation2 + $0x50] sm:$0xff] 0.0
          %234 = vst [vmem:[#allocation2 + $0x58] sm:$0xff] 0.0
          %235 = vst [vmem:[#allocation2 + $0x60] sm:$0xff] 0.0
          %236 = vst [vmem:[#allocation2 + $0x68] sm:$0xff] 0.0
          %237 = vst [vmem:[#allocation2 + $0x70] sm:$0xff] 0.0
          %238 = vst [vmem:[#allocation2 + $0x78] sm:$0xff] 0.0
          %239 = vst [vmem:[#allocation2 + $0x80] sm:$0xff] 0.0
          %240 = vst [vmem:[#allocation2 + $0x88] sm:$0xff] 0.0
          %241 = vst [vmem:[#allocation2 + $0x90] sm:$0xff] 0.0
          %242 = vst [vmem:[#allocation2 + $0x98] sm:$0xff] 0.0
          %243 = vst [vmem:[#allocation2 + $0xa0] sm:$0xff] 0.0
          %244 = vst [vmem:[#allocation2 + $0xa8] sm:$0xff] 0.0
          %245 = vst [vmem:[#allocation2 + $0xb0] sm:$0xff] 0.0
          %246 = vst [vmem:[#allocation2 + $0xb8] sm:$0xff] 0.0
          %247 = vst [vmem:[#allocation2 + $0xc0] sm:$0xff] 0.0
          %248 = vst [vmem:[#allocation2 + $0xc8] sm:$0xff] 0.0
          %249 = vst [vmem:[#allocation2 + $0xd0] sm:$0xff] 0.0
          %250 = vst [vmem:[#allocation2 + $0xd8] sm:$0xff] 0.0
          %251 = vst [vmem:[#allocation2 + $0xe0] sm:$0xff] 0.0
          %252 = vst [vmem:[#allocation2 + $0xe8] sm:$0xff] 0.0
          %253 = vst [vmem:[#allocation2 + $0xf0] sm:$0xff] 0.0
          %254 = vst [vmem:[#allocation2 + $0xf8] sm:$0xff] 0.0
        $region40: #{tpu_custom_call.1} parent=27 // pred_fallthru
          _
        %v255 = vld [vmem:[#allocation2] sm:$0xff]
        %v256 = vld [vmem:[#allocation2 + $0x8] sm:$0xff]
        %v257 = vld [vmem:[#allocation2 + $0x10] sm:$0xff]
        %v258 = vld [vmem:[#allocation2 + $0x18] sm:$0xff]
        %v259 = vld [vmem:[#allocation2 + $0x20] sm:$0xff]
        %v260 = vld [vmem:[#allocation2 + $0x28] sm:$0xff]
        %v261 = vld [vmem:[#allocation2 + $0x30] sm:$0xff]
        %v262 = vld [vmem:[#allocation2 + $0x38] sm:$0xff]
        %v263 = vld [vmem:[#allocation2 + $0x40] sm:$0xff]
        %v264 = vld [vmem:[#allocation2 + $0x48] sm:$0xff]
        %v265 = vld [vmem:[#allocation2 + $0x50] sm:$0xff]
        %v266 = vld [vmem:[#allocation2 + $0x58] sm:$0xff]
        %v267 = vld [vmem:[#allocation2 + $0x60] sm:$0xff]
        %v268 = vld [vmem:[#allocation2 + $0x68] sm:$0xff]
        %v269 = vld [vmem:[#allocation2 + $0x70] sm:$0xff]
        %v270 = vld [vmem:[#allocation2 + $0x78] sm:$0xff]
        %v271 = vld [vmem:[#allocation2 + $0x80] sm:$0xff]
        %v272 = vld [vmem:[#allocation2 + $0x88] sm:$0xff]
        %v273 = vld [vmem:[#allocation2 + $0x90] sm:$0xff]
        %v274 = vld [vmem:[#allocation2 + $0x98] sm:$0xff]
        %v275 = vld [vmem:[#allocation2 + $0xa0] sm:$0xff]
        %v276 = vld [vmem:[#allocation2 + $0xa8] sm:$0xff]
        %v277 = vld [vmem:[#allocation2 + $0xb0] sm:$0xff]
        %v278 = vld [vmem:[#allocation2 + $0xb8] sm:$0xff]
        %v279 = vld [vmem:[#allocation2 + $0xc0] sm:$0xff]
        %v280 = vld [vmem:[#allocation2 + $0xc8] sm:$0xff]
        %v281 = vld [vmem:[#allocation2 + $0xd0] sm:$0xff]
        %v282 = vld [vmem:[#allocation2 + $0xd8] sm:$0xff]
        %v283 = vld [vmem:[#allocation2 + $0xe0] sm:$0xff]
        %v284 = vld [vmem:[#allocation2 + $0xe8] sm:$0xff]
        %v285 = vld [vmem:[#allocation2 + $0xf0] sm:$0xff]
        %v286 = vld [vmem:[#allocation2 + $0xf8] sm:$0xff]
        %v287 = vld [vmem:[%s189] sm:$0xff]
        %v288 = vld [vmem:[%s189 + $0x8] sm:$0xff]
        %v289 = vld [vmem:[%s189 + $0x10] sm:$0xff]
        %v290 = vld [vmem:[%s189 + $0x18] sm:$0xff]
        %v291 = vld [vmem:[%s189 + $0x20] sm:$0xff]
        %v292 = vld [vmem:[%s189 + $0x28] sm:$0xff]
        %v293 = vld [vmem:[%s189 + $0x30] sm:$0xff]
        %v294 = vld [vmem:[%s189 + $0x38] sm:$0xff]
        %v295 = vld [vmem:[%s189 + $0x40] sm:$0xff]
        %v296 = vld [vmem:[%s189 + $0x48] sm:$0xff]
        %v297 = vld [vmem:[%s189 + $0x50] sm:$0xff]
        %v298 = vld [vmem:[%s189 + $0x58] sm:$0xff]
        %v299 = vld [vmem:[%s189 + $0x60] sm:$0xff]
        %v300 = vld [vmem:[%s189 + $0x68] sm:$0xff]
        %v301 = vld [vmem:[%s189 + $0x70] sm:$0xff]
        %v302 = vld [vmem:[%s189 + $0x78] sm:$0xff]
        %v303 = vld [vmem:[%s189 + $0x80] sm:$0xff]
        %v304 = vld [vmem:[%s189 + $0x88] sm:$0xff]
        %v305 = vld [vmem:[%s189 + $0x90] sm:$0xff]
        %v306 = vld [vmem:[%s189 + $0x98] sm:$0xff]
        %v307 = vld [vmem:[%s189 + $0xa0] sm:$0xff]
        %v308 = vld [vmem:[%s189 + $0xa8] sm:$0xff]
        %v309 = vld [vmem:[%s189 + $0xb0] sm:$0xff]
        %v310 = vld [vmem:[%s189 + $0xb8] sm:$0xff]
        %v311 = vld [vmem:[%s189 + $0xc0] sm:$0xff]
        %v312 = vld [vmem:[%s189 + $0xc8] sm:$0xff]
        %v313 = vld [vmem:[%s189 + $0xd0] sm:$0xff]
        %v314 = vld [vmem:[%s189 + $0xd8] sm:$0xff]
        %v315 = vld [vmem:[%s189 + $0xe0] sm:$0xff]
        %v316 = vld [vmem:[%s189 + $0xe8] sm:$0xff]
        %v317 = vld [vmem:[%s189 + $0xf0] sm:$0xff]
        %v318 = vld [vmem:[%s189 + $0xf8] sm:$0xff]
        %v319 = vld [vmem:[#allocation6] sm:$0xf]
        %v320 = vld [vmem:[#allocation6 + $0x4] sm:$0xf]
        %v321 = vld [vmem:[#allocation6 + $0x8] sm:$0xf]
        %v322 = vld [vmem:[#allocation6 + $0xc] sm:$0xf]
        %v323 = vld [vmem:[#allocation6 + $0x10] sm:$0xf]
        %v324 = vld [vmem:[#allocation6 + $0x14] sm:$0xf]
        %v325 = vld [vmem:[#allocation6 + $0x18] sm:$0xf]
        %v326 = vld [vmem:[#allocation6 + $0x1c] sm:$0xf]
        %v327 = vld [vmem:[#allocation6 + $0x20] sm:$0xf]
        %v328 = vld [vmem:[#allocation6 + $0x24] sm:$0xf]
        %v329 = vld [vmem:[#allocation6 + $0x28] sm:$0xf]
        %v330 = vld [vmem:[#allocation6 + $0x2c] sm:$0xf]
        %v331 = vld [vmem:[#allocation6 + $0x30] sm:$0xf]
        %v332 = vld [vmem:[#allocation6 + $0x34] sm:$0xf]
        %v333 = vld [vmem:[#allocation6 + $0x38] sm:$0xf]
        %v334 = vld [vmem:[#allocation6 + $0x3c] sm:$0xf]
        %v335 = vld [vmem:[#allocation6 + $0x40] sm:$0xf]
        %v336 = vld [vmem:[#allocation6 + $0x44] sm:$0xf]
        %v337 = vld [vmem:[#allocation6 + $0x48] sm:$0xf]
        %v338 = vld [vmem:[#allocation6 + $0x4c] sm:$0xf]
        %v339 = vld [vmem:[#allocation6 + $0x50] sm:$0xf]
        %v340 = vld [vmem:[#allocation6 + $0x54] sm:$0xf]
        %v341 = vld [vmem:[#allocation6 + $0x58] sm:$0xf]
        %v342 = vld [vmem:[#allocation6 + $0x5c] sm:$0xf]
        %v343 = vld [vmem:[#allocation6 + $0x60] sm:$0xf]
        %v344 = vld [vmem:[#allocation6 + $0x64] sm:$0xf]
        %v345 = vld [vmem:[#allocation6 + $0x68] sm:$0xf]
        %v346 = vld [vmem:[#allocation6 + $0x6c] sm:$0xf]
        %v347 = vld [vmem:[#allocation6 + $0x70] sm:$0xf]
        %v348 = vld [vmem:[#allocation6 + $0x74] sm:$0xf]
        %v349 = vld [vmem:[#allocation6 + $0x78] sm:$0xf]
        %v350 = vld [vmem:[#allocation6 + $0x7c] sm:$0xf]
        %v383 = vunpack.c.l.b16 %v287
        %v384 = vunpack.c.h.b16 %v287
        %v385 = vunpack.c.l.b16 %v288
        %v386 = vunpack.c.h.b16 %v288
        %v387 = vunpack.c.l.b16 %v289
        %v388 = vunpack.c.h.b16 %v289
        %v389 = vunpack.c.l.b16 %v290
        %v390 = vunpack.c.h.b16 %v290
        %v391 = vunpack.c.l.b16 %v291
        %v392 = vunpack.c.h.b16 %v291
        %v393 = vunpack.c.l.b16 %v292
        %v394 = vunpack.c.h.b16 %v292
        %v395 = vunpack.c.l.b16 %v293
        %v396 = vunpack.c.h.b16 %v293
        %v397 = vunpack.c.l.b16 %v294
        %v398 = vunpack.c.h.b16 %v294
        %v399 = vunpack.c.l.b16 %v295
        %v400 = vunpack.c.h.b16 %v295
        %v401 = vunpack.c.l.b16 %v296
        %v402 = vunpack.c.h.b16 %v296
        %v403 = vunpack.c.l.b16 %v297
        %v404 = vunpack.c.h.b16 %v297
        %v405 = vunpack.c.l.b16 %v298
        %v406 = vunpack.c.h.b16 %v298
        %v407 = vunpack.c.l.b16 %v299
        %v408 = vunpack.c.h.b16 %v299
        %v409 = vunpack.c.l.b16 %v300
        %v410 = vunpack.c.h.b16 %v300
        %v411 = vunpack.c.l.b16 %v301
        %v412 = vunpack.c.h.b16 %v301
        %v413 = vunpack.c.l.b16 %v302
        %v414 = vunpack.c.h.b16 %v302
        %v415 = vunpack.c.l.b16 %v303
        %v416 = vunpack.c.h.b16 %v303
        %v417 = vunpack.c.l.b16 %v304
        %v418 = vunpack.c.h.b16 %v304
        %v419 = vunpack.c.l.b16 %v305
        %v420 = vunpack.c.h.b16 %v305
        %v421 = vunpack.c.l.b16 %v306
        %v422 = vunpack.c.h.b16 %v306
        %v423 = vunpack.c.l.b16 %v307
        %v424 = vunpack.c.h.b16 %v307
        %v425 = vunpack.c.l.b16 %v308
        %v426 = vunpack.c.h.b16 %v308
        %v427 = vunpack.c.l.b16 %v309
        %v428 = vunpack.c.h.b16 %v309
        %v429 = vunpack.c.l.b16 %v310
        %v430 = vunpack.c.h.b16 %v310
        %v431 = vunpack.c.l.b16 %v311
        %v432 = vunpack.c.h.b16 %v311
        %v433 = vunpack.c.l.b16 %v312
        %v434 = vunpack.c.h.b16 %v312
        %v435 = vunpack.c.l.b16 %v313
        %v436 = vunpack.c.h.b16 %v313
        %v437 = vunpack.c.l.b16 %v314
        %v438 = vunpack.c.h.b16 %v314
        %v439 = vunpack.c.l.b16 %v315
        %v440 = vunpack.c.h.b16 %v315
        %v441 = vunpack.c.l.b16 %v316
        %v442 = vunpack.c.h.b16 %v316
        %v443 = vunpack.c.l.b16 %v317
        %v444 = vunpack.c.h.b16 %v317
        %v445 = vunpack.c.l.b16 %v318
        %v446 = vunpack.c.h.b16 %v318
        %v447 = vpack.c.b16 %v385, %v383
        %v448 = vpack.c.b16 %v386, %v384
        %v449 = vpack.c.b16 %v389, %v387
        %v450 = vpack.c.b16 %v390, %v388
        %v451 = vpack.c.b16 %v393, %v391
        %v452 = vpack.c.b16 %v394, %v392
        %v453 = vpack.c.b16 %v397, %v395
        %v454 = vpack.c.b16 %v398, %v396
        %v455 = vpack.c.b16 %v401, %v399
        %v456 = vpack.c.b16 %v402, %v400
        %v457 = vpack.c.b16 %v405, %v403
        %v458 = vpack.c.b16 %v406, %v404
        %v459 = vpack.c.b16 %v409, %v407
        %v460 = vpack.c.b16 %v410, %v408
        %v461 = vpack.c.b16 %v413, %v411
        %v462 = vpack.c.b16 %v414, %v412
        %v463 = vpack.c.b16 %v417, %v415
        %v464 = vpack.c.b16 %v418, %v416
        %v465 = vpack.c.b16 %v421, %v419
        %v466 = vpack.c.b16 %v422, %v420
        %v467 = vpack.c.b16 %v425, %v423
        %v468 = vpack.c.b16 %v426, %v424
        %v469 = vpack.c.b16 %v429, %v427
        %v470 = vpack.c.b16 %v430, %v428
        %v471 = vpack.c.b16 %v433, %v431
        %v472 = vpack.c.b16 %v434, %v432
        %v473 = vpack.c.b16 %v437, %v435
        %v474 = vpack.c.b16 %v438, %v436
        %v475 = vpack.c.b16 %v441, %v439
        %v476 = vpack.c.b16 %v442, %v440
        %v477 = vpack.c.b16 %v445, %v443
        %v478 = vpack.c.b16 %v446, %v444
        %v543 = vunpack.c.l.b16 %v319
        %v544 = vunpack.c.l.b16 %v320
        %v545 = vunpack.c.l.b16 %v321
        %v546 = vunpack.c.l.b16 %v322
        %v547 = vunpack.c.l.b16 %v323
        %v548 = vunpack.c.l.b16 %v324
        %v549 = vunpack.c.l.b16 %v325
        %v550 = vunpack.c.l.b16 %v326
        %v551 = vunpack.c.l.b16 %v327
        %v552 = vunpack.c.l.b16 %v328
        %v553 = vunpack.c.l.b16 %v329
        %v554 = vunpack.c.l.b16 %v330
        %v555 = vunpack.c.l.b16 %v331
        %v556 = vunpack.c.l.b16 %v332
        %v557 = vunpack.c.l.b16 %v333
        %v558 = vunpack.c.l.b16 %v334
        %v559 = vunpack.c.l.b16 %v335
        %v560 = vunpack.c.l.b16 %v336
        %v561 = vunpack.c.l.b16 %v337
        %v562 = vunpack.c.l.b16 %v338
        %v563 = vunpack.c.l.b16 %v339
        %v564 = vunpack.c.l.b16 %v340
        %v565 = vunpack.c.l.b16 %v341
        %v566 = vunpack.c.l.b16 %v342
        %v567 = vunpack.c.l.b16 %v343
        %v568 = vunpack.c.l.b16 %v344
        %v569 = vunpack.c.l.b16 %v345
        %v570 = vunpack.c.l.b16 %v346
        %v571 = vunpack.c.l.b16 %v347
        %v572 = vunpack.c.l.b16 %v348
        %v573 = vunpack.c.l.b16 %v349
        %v574 = vunpack.c.l.b16 %v350
        %v575 = vpack.c.b16 %v544, %v543
        %v576 = vpack.c.b16 %v546, %v545
        %v577 = vpack.c.b16 %v548, %v547
        %v578 = vpack.c.b16 %v550, %v549
        %v579 = vpack.c.b16 %v552, %v551
        %v580 = vpack.c.b16 %v554, %v553
        %v581 = vpack.c.b16 %v556, %v555
        %v582 = vpack.c.b16 %v558, %v557
        %v583 = vpack.c.b16 %v560, %v559
        %v584 = vpack.c.b16 %v562, %v561
        %v585 = vpack.c.b16 %v564, %v563
        %v586 = vpack.c.b16 %v566, %v565
        %v587 = vpack.c.b16 %v568, %v567
        %v588 = vpack.c.b16 %v570, %v569
        %v589 = vpack.c.b16 %v572, %v571
        %v590 = vpack.c.b16 %v574, %v573
        %607 = vmatprep.subr.bf16.mxu0 0
        %608 = vmatpush1.bf16.msra.mxu0 %v575
        %609 = vmatprep.subr.bf16.mxu0 0
        %610 = vmatpush1.bf16.msra.mxu0 %v576
        %611 = vmatprep.subr.bf16.mxu0 0
        %612 = vmatpush1.bf16.msra.mxu0 %v577
        %613 = vmatprep.subr.bf16.mxu0 0
        %614 = vmatpush1.bf16.msra.mxu0 %v578
        %615 = vmatprep.subr.bf16.mxu0 0
        %616 = vmatpush1.bf16.msra.mxu0 %v579
        %617 = vmatprep.subr.bf16.mxu0 0
        %618 = vmatpush1.bf16.msra.mxu0 %v580
        %619 = vmatprep.subr.bf16.mxu0 0
        %620 = vmatpush1.bf16.msra.mxu0 %v581
        %621 = vmatprep.subr.bf16.mxu0 0
        %622 = vmatpush1.bf16.msra.mxu0 %v582
        %623 = vmatprep.subr.bf16.mxu0 0
        %624 = vmatpush1.bf16.msra.mxu0 %v583
        %625 = vmatprep.subr.bf16.mxu0 0
        %626 = vmatpush1.bf16.msra.mxu0 %v584
        %627 = vmatprep.subr.bf16.mxu0 0
        %628 = vmatpush1.bf16.msra.mxu0 %v585
        %629 = vmatprep.subr.bf16.mxu0 0
        %630 = vmatpush1.bf16.msra.mxu0 %v586
        %631 = vmatprep.subr.bf16.mxu0 0
        %632 = vmatpush1.bf16.msra.mxu0 %v587
        %633 = vmatprep.subr.bf16.mxu0 0
        %634 = vmatpush1.bf16.msra.mxu0 %v588
        %635 = vmatprep.subr.bf16.mxu0 0
        %636 = vmatpush1.bf16.msra.mxu0 %v589
        %637 = vmatprep.subr.bf16.mxu0 0
        %638 = vmatpush1.bf16.msra.mxu0 %v590
        %639 = vmatprep.mubr.bf16.mxu0 %v448
        %640 = vmatmul.mubr.bf16.gmra.mrb[0].mxu0 %v447
        %v641 = vpop.f32.mrb[0].mxu0
        %v642 = vadd.f32 0.0, %v641
        %v643 = vpop.f32.mrb[0].mxu0
        %v644 = vpop.f32.mrb[0].mxu0
        %v645 = vadd.f32 0.0, %v644
        %v646 = vpop.f32.mrb[0].mxu0
        %647 = vmatprep.mubr.bf16.mxu0 %v450
        %648 = vmatmul.mubr.bf16.gmra.mrb[0].mxu0 %v449
        %v649 = vpop.f32.mrb[0].mxu0
        %v650 = vadd.f32 0.0, %v649
        %v651 = vpop.f32.mrb[0].mxu0
        %v652 = vpop.f32.mrb[0].mxu0
        %v653 = vadd.f32 0.0, %v652
        %v654 = vpop.f32.mrb[0].mxu0
        %655 = vmatprep.mubr.bf16.mxu0 %v452
        %656 = vmatmul.mubr.bf16.gmra.mrb[0].mxu0 %v451
        %v657 = vpop.f32.mrb[0].mxu0
        %v658 = vadd.f32 0.0, %v657
        %v659 = vpop.f32.mrb[0].mxu0
        %v660 = vpop.f32.mrb[0].mxu0
        %v661 = vadd.f32 0.0, %v660
        %v662 = vpop.f32.mrb[0].mxu0
        %663 = vmatprep.mubr.bf16.mxu0 %v454
        %664 = vmatmul.mubr.bf16.gmra.mrb[0].mxu0 %v453
        %v665 = vpop.f32.mrb[0].mxu0
        %v666 = vadd.f32 0.0, %v665
        %v667 = vpop.f32.mrb[0].mxu0
        %v668 = vpop.f32.mrb[0].mxu0
        %v669 = vadd.f32 0.0, %v668
        %v670 = vpop.f32.mrb[0].mxu0
        %671 = vmatprep.mubr.bf16.mxu0 %v456
        %672 = vmatmul.mubr.bf16.gmra.mrb[0].mxu0 %v455
        %v673 = vpop.f32.mrb[0].mxu0
        %v674 = vadd.f32 0.0, %v673
        %v675 = vpop.f32.mrb[0].mxu0
        %v676 = vpop.f32.mrb[0].mxu0
        %v677 = vadd.f32 0.0, %v676
        %v678 = vpop.f32.mrb[0].mxu0
        %679 = vmatprep.mubr.bf16.mxu0 %v458
        %680 = vmatmul.mubr.bf16.gmra.mrb[0].mxu0 %v457
        %v681 = vpop.f32.mrb[0].mxu0
        %v682 = vadd.f32 0.0, %v681
        %v683 = vpop.f32.mrb[0].mxu0
        %v684 = vpop.f32.mrb[0].mxu0
        %v685 = vadd.f32 0.0, %v684
        %v686 = vpop.f32.mrb[0].mxu0
        %687 = vmatprep.mubr.bf16.mxu0 %v460
        %688 = vmatmul.mubr.bf16.gmra.mrb[0].mxu0 %v459
        %v689 = vpop.f32.mrb[0].mxu0
        %v690 = vadd.f32 0.0, %v689
        %v691 = vpop.f32.mrb[0].mxu0
        %v692 = vpop.f32.mrb[0].mxu0
        %v693 = vadd.f32 0.0, %v692
        %v694 = vpop.f32.mrb[0].mxu0
        %695 = vmatprep.mubr.bf16.mxu0 %v462
        %696 = vmatmul.mubr.bf16.gmra.mrb[0].mxu0 %v461
        %v697 = vpop.f32.mrb[0].mxu0
        %v698 = vadd.f32 0.0, %v697
        %v699 = vpop.f32.mrb[0].mxu0
        %v700 = vpop.f32.mrb[0].mxu0
        %v701 = vadd.f32 0.0, %v700
        %v702 = vpop.f32.mrb[0].mxu0
        %703 = vmatprep.mubr.bf16.mxu0 %v464
        %704 = vmatmul.mubr.bf16.gmra.mrb[0].mxu0 %v463
        %v705 = vpop.f32.mrb[0].mxu0
        %v706 = vadd.f32 0.0, %v705
        %v707 = vpop.f32.mrb[0].mxu0
        %v708 = vpop.f32.mrb[0].mxu0
        %v709 = vadd.f32 0.0, %v708
        %v710 = vpop.f32.mrb[0].mxu0
        %711 = vmatprep.mubr.bf16.mxu0 %v466
        %712 = vmatmul.mubr.bf16.gmra.mrb[0].mxu0 %v465
        %v713 = vpop.f32.mrb[0].mxu0
        %v714 = vadd.f32 0.0, %v713
        %v715 = vpop.f32.mrb[0].mxu0
        %v716 = vpop.f32.mrb[0].mxu0
        %v717 = vadd.f32 0.0, %v716
        %v718 = vpop.f32.mrb[0].mxu0
        %719 = vmatprep.mubr.bf16.mxu0 %v468
        %720 = vmatmul.mubr.bf16.gmra.mrb[0].mxu0 %v467
        %v721 = vpop.f32.mrb[0].mxu0
        %v722 = vadd.f32 0.0, %v721
        %v723 = vpop.f32.mrb[0].mxu0
        %v724 = vpop.f32.mrb[0].mxu0
        %v725 = vadd.f32 0.0, %v724
        %v726 = vpop.f32.mrb[0].mxu0
        %727 = vmatprep.mubr.bf16.mxu0 %v470
        %728 = vmatmul.mubr.bf16.gmra.mrb[0].mxu0 %v469
        %v729 = vpop.f32.mrb[0].mxu0
        %v730 = vadd.f32 0.0, %v729
        %v731 = vpop.f32.mrb[0].mxu0
        %v732 = vpop.f32.mrb[0].mxu0
        %v733 = vadd.f32 0.0, %v732
        %v734 = vpop.f32.mrb[0].mxu0
        %735 = vmatprep.mubr.bf16.mxu0 %v472
        %736 = vmatmul.mubr.bf16.gmra.mrb[0].mxu0 %v471
        %v737 = vpop.f32.mrb[0].mxu0
        %v738 = vadd.f32 0.0, %v737
        %v739 = vpop.f32.mrb[0].mxu0
        %v740 = vpop.f32.mrb[0].mxu0
        %v741 = vadd.f32 0.0, %v740
        %v742 = vpop.f32.mrb[0].mxu0
        %743 = vmatprep.mubr.bf16.mxu0 %v474
        %744 = vmatmul.mubr.bf16.gmra.mrb[0].mxu0 %v473
        %v745 = vpop.f32.mrb[0].mxu0
        %v746 = vadd.f32 0.0, %v745
        %v747 = vpop.f32.mrb[0].mxu0
        %v748 = vpop.f32.mrb[0].mxu0
        %v749 = vadd.f32 0.0, %v748
        %v750 = vpop.f32.mrb[0].mxu0
        %751 = vmatprep.mubr.bf16.mxu0 %v476
        %752 = vmatmul.mubr.bf16.gmra.mrb[0].mxu0 %v475
        %v753 = vpop.f32.mrb[0].mxu0
        %v754 = vadd.f32 0.0, %v753
        %v755 = vpop.f32.mrb[0].mxu0
        %v756 = vpop.f32.mrb[0].mxu0
        %v757 = vadd.f32 0.0, %v756
        %v758 = vpop.f32.mrb[0].mxu0
        %759 = vmatprep.mubr.bf16.mxu0 %v478
        %760 = vmatmul.mubr.bf16.gmra.mrb[0].mxu0 %v477
        %v761 = vpop.f32.mrb[0].mxu0
        %v762 = vadd.f32 0.0, %v761
        %v763 = vpop.f32.mrb[0].mxu0
        %v764 = vpop.f32.mrb[0].mxu0
        %v765 = vadd.f32 0.0, %v764
        %v766 = vpop.f32.mrb[0].mxu0
        %767 = vdwg.mxu0
        %v768 = vadd.f32 %v255, %v642
        %v769 = vadd.f32 %v256, %v645
        %v770 = vadd.f32 %v257, %v650
        %v771 = vadd.f32 %v258, %v653
        %v772 = vadd.f32 %v259, %v658
        %v773 = vadd.f32 %v260, %v661
        %v774 = vadd.f32 %v261, %v666
        %v775 = vadd.f32 %v262, %v669
        %v776 = vadd.f32 %v263, %v674
        %v777 = vadd.f32 %v264, %v677
        %v778 = vadd.f32 %v265, %v682
        %v779 = vadd.f32 %v266, %v685
        %v780 = vadd.f32 %v267, %v690
        %v781 = vadd.f32 %v268, %v693
        %v782 = vadd.f32 %v269, %v698
        %v783 = vadd.f32 %v270, %v701
        %v784 = vadd.f32 %v271, %v706
        %v785 = vadd.f32 %v272, %v709
        %v786 = vadd.f32 %v273, %v714
        %v787 = vadd.f32 %v274, %v717
        %v788 = vadd.f32 %v275, %v722
        %v789 = vadd.f32 %v276, %v725
        %v790 = vadd.f32 %v277, %v730
        %v791 = vadd.f32 %v278, %v733
        %v792 = vadd.f32 %v279, %v738
        %v793 = vadd.f32 %v280, %v741
        %v794 = vadd.f32 %v281, %v746
        %v795 = vadd.f32 %v282, %v749
        %v796 = vadd.f32 %v283, %v754
        %v797 = vadd.f32 %v284, %v757
        %v798 = vadd.f32 %v285, %v762
        %v799 = vadd.f32 %v286, %v765
        %800 = vst [vmem:[#allocation2] sm:$0xff] %v768
        %801 = vst [vmem:[#allocation2 + $0x8] sm:$0xff] %v769
        %802 = vst [vmem:[#allocation2 + $0x10] sm:$0xff] %v770
        %803 = vst [vmem:[#allocation2 + $0x18] sm:$0xff] %v771
        %804 = vst [vmem:[#allocation2 + $0x20] sm:$0xff] %v772
        %805 = vst [vmem:[#allocation2 + $0x28] sm:$0xff] %v773
        %806 = vst [vmem:[#allocation2 + $0x30] sm:$0xff] %v774
        %807 = vst [vmem:[#allocation2 + $0x38] sm:$0xff] %v775
        %808 = vst [vmem:[#allocation2 + $0x40] sm:$0xff] %v776
        %809 = vst [vmem:[#allocation2 + $0x48] sm:$0xff] %v777
        %810 = vst [vmem:[#allocation2 + $0x50] sm:$0xff] %v778
        %811 = vst [vmem:[#allocation2 + $0x58] sm:$0xff] %v779
        %812 = vst [vmem:[#allocation2 + $0x60] sm:$0xff] %v780
        %813 = vst [vmem:[#allocation2 + $0x68] sm:$0xff] %v781
        %814 = vst [vmem:[#allocation2 + $0x70] sm:$0xff] %v782
        %815 = vst [vmem:[#allocation2 + $0x78] sm:$0xff] %v783
        %816 = vst [vmem:[#allocation2 + $0x80] sm:$0xff] %v784
        %817 = vst [vmem:[#allocation2 + $0x88] sm:$0xff] %v785
        %818 = vst [vmem:[#allocation2 + $0x90] sm:$0xff] %v786
        %819 = vst [vmem:[#allocation2 + $0x98] sm:$0xff] %v787
        %820 = vst [vmem:[#allocation2 + $0xa0] sm:$0xff] %v788
        %821 = vst [vmem:[#allocation2 + $0xa8] sm:$0xff] %v789
        %822 = vst [vmem:[#allocation2 + $0xb0] sm:$0xff] %v790
        %823 = vst [vmem:[#allocation2 + $0xb8] sm:$0xff] %v791
        %824 = vst [vmem:[#allocation2 + $0xc0] sm:$0xff] %v792
        %825 = vst [vmem:[#allocation2 + $0xc8] sm:$0xff] %v793
        %826 = vst [vmem:[#allocation2 + $0xd0] sm:$0xff] %v794
        %827 = vst [vmem:[#allocation2 + $0xd8] sm:$0xff] %v795
        %828 = vst [vmem:[#allocation2 + $0xe0] sm:$0xff] %v796
        %829 = vst [vmem:[#allocation2 + $0xe8] sm:$0xff] %v797
        %830 = vst [vmem:[#allocation2 + $0xf0] sm:$0xff] %v798
        %831 = vst [vmem:[#allocation2 + $0xf8] sm:$0xff] %v799
        // Predicated region
        $region41: #{tpu_custom_call.1} parent=27 // pred_check
          %p832 = pneg %p219
        $region42: #{tpu_custom_call.1} parent=27 // pred_check_branch
          %834 = sbr.rel (%p832) target = $region44
        $region43: #{tpu_custom_call.1} parent=27 // pred_region
          %v835 = vld [vmem:[#allocation2] sm:$0xff]
          %v836 = vld [vmem:[#allocation2 + $0x8] sm:$0xff]
          %v837 = vld [vmem:[#allocation2 + $0x10] sm:$0xff]
          %v838 = vld [vmem:[#allocation2 + $0x18] sm:$0xff]
          %v839 = vld [vmem:[#allocation2 + $0x20] sm:$0xff]
          %v840 = vld [vmem:[#allocation2 + $0x28] sm:$0xff]
          %v841 = vld [vmem:[#allocation2 + $0x30] sm:$0xff]
          %v842 = vld [vmem:[#allocation2 + $0x38] sm:$0xff]
          %v843 = vld [vmem:[#allocation2 + $0x40] sm:$0xff]
          %v844 = vld [vmem:[#allocation2 + $0x48] sm:$0xff]
          %v845 = vld [vmem:[#allocation2 + $0x50] sm:$0xff]
          %v846 = vld [vmem:[#allocation2 + $0x58] sm:$0xff]
          %v847 = vld [vmem:[#allocation2 + $0x60] sm:$0xff]
          %v848 = vld [vmem:[#allocation2 + $0x68] sm:$0xff]
          %v849 = vld [vmem:[#allocation2 + $0x70] sm:$0xff]
          %v850 = vld [vmem:[#allocation2 + $0x78] sm:$0xff]
          %v851 = vld [vmem:[#allocation2 + $0x80] sm:$0xff]
          %v852 = vld [vmem:[#allocation2 + $0x88] sm:$0xff]
          %v853 = vld [vmem:[#allocation2 + $0x90] sm:$0xff]
          %v854 = vld [vmem:[#allocation2 + $0x98] sm:$0xff]
          %v855 = vld [vmem:[#allocation2 + $0xa0] sm:$0xff]
          %v856 = vld [vmem:[#allocation2 + $0xa8] sm:$0xff]
          %v857 = vld [vmem:[#allocation2 + $0xb0] sm:$0xff]
          %v858 = vld [vmem:[#allocation2 + $0xb8] sm:$0xff]
          %v859 = vld [vmem:[#allocation2 + $0xc0] sm:$0xff]
          %v860 = vld [vmem:[#allocation2 + $0xc8] sm:$0xff]
          %v861 = vld [vmem:[#allocation2 + $0xd0] sm:$0xff]
          %v862 = vld [vmem:[#allocation2 + $0xd8] sm:$0xff]
          %v863 = vld [vmem:[#allocation2 + $0xe0] sm:$0xff]
          %v864 = vld [vmem:[#allocation2 + $0xe8] sm:$0xff]
          %v865 = vld [vmem:[#allocation2 + $0xf0] sm:$0xff]
          %v866 = vld [vmem:[#allocation2 + $0xf8] sm:$0xff]
          %v867 = vpack.c.bf16 %v836, %v835
          %v868 = vpack.c.bf16 %v838, %v837
          %v869 = vpack.c.bf16 %v840, %v839
          %v870 = vpack.c.bf16 %v842, %v841
          %v871 = vpack.c.bf16 %v844, %v843
          %v872 = vpack.c.bf16 %v846, %v845
          %v873 = vpack.c.bf16 %v848, %v847
          %v874 = vpack.c.bf16 %v850, %v849
          %v875 = vpack.c.bf16 %v852, %v851
          %v876 = vpack.c.bf16 %v854, %v853
          %v877 = vpack.c.bf16 %v856, %v855
          %v878 = vpack.c.bf16 %v858, %v857
          %v879 = vpack.c.bf16 %v860, %v859
          %v880 = vpack.c.bf16 %v862, %v861
          %v881 = vpack.c.bf16 %v864, %v863
          %v882 = vpack.c.bf16 %v866, %v865
          %v899 = vunpack.c.l.b16 %v867
          %v900 = vunpack.c.h.b16 %v867
          %v901 = vunpack.c.l.b16 %v868
          %v902 = vunpack.c.h.b16 %v868
          %v903 = vunpack.c.l.b16 %v869
          %v904 = vunpack.c.h.b16 %v869
          %v905 = vunpack.c.l.b16 %v870
          %v906 = vunpack.c.h.b16 %v870
          %v907 = vunpack.c.l.b16 %v871
          %v908 = vunpack.c.h.b16 %v871
          %v909 = vunpack.c.l.b16 %v872
          %v910 = vunpack.c.h.b16 %v872
          %v911 = vunpack.c.l.b16 %v873
          %v912 = vunpack.c.h.b16 %v873
          %v913 = vunpack.c.l.b16 %v874
          %v914 = vunpack.c.h.b16 %v874
          %v915 = vunpack.c.l.b16 %v875
          %v916 = vunpack.c.h.b16 %v875
          %v917 = vunpack.c.l.b16 %v876
          %v918 = vunpack.c.h.b16 %v876
          %v919 = vunpack.c.l.b16 %v877
          %v920 = vunpack.c.h.b16 %v877
          %v921 = vunpack.c.l.b16 %v878
          %v922 = vunpack.c.h.b16 %v878
          %v923 = vunpack.c.l.b16 %v879
          %v924 = vunpack.c.h.b16 %v879
          %v925 = vunpack.c.l.b16 %v880
          %v926 = vunpack.c.h.b16 %v880
          %v927 = vunpack.c.l.b16 %v881
          %v928 = vunpack.c.h.b16 %v881
          %v929 = vunpack.c.l.b16 %v882
          %v930 = vunpack.c.h.b16 %v882
          %v931 = vpack.c.b16 %v899, %v899
          %v932 = vpack.c.b16 %v900, %v900
          %v933 = vpack.c.b16 %v901, %v901
          %v934 = vpack.c.b16 %v902, %v902
          %v935 = vpack.c.b16 %v903, %v903
          %v936 = vpack.c.b16 %v904, %v904
          %v937 = vpack.c.b16 %v905, %v905
          %v938 = vpack.c.b16 %v906, %v906
          %v939 = vpack.c.b16 %v907, %v907
          %v940 = vpack.c.b16 %v908, %v908
          %v941 = vpack.c.b16 %v909, %v909
          %v942 = vpack.c.b16 %v910, %v910
          %v943 = vpack.c.b16 %v911, %v911
          %v944 = vpack.c.b16 %v912, %v912
          %v945 = vpack.c.b16 %v913, %v913
          %v946 = vpack.c.b16 %v914, %v914
          %v947 = vpack.c.b16 %v915, %v915
          %v948 = vpack.c.b16 %v916, %v916
          %v949 = vpack.c.b16 %v917, %v917
          %v950 = vpack.c.b16 %v918, %v918
          %v951 = vpack.c.b16 %v919, %v919
          %v952 = vpack.c.b16 %v920, %v920
          %v953 = vpack.c.b16 %v921, %v921
          %v954 = vpack.c.b16 %v922, %v922
          %v955 = vpack.c.b16 %v923, %v923
          %v956 = vpack.c.b16 %v924, %v924
          %v957 = vpack.c.b16 %v925, %v925
          %v958 = vpack.c.b16 %v926, %v926
          %v959 = vpack.c.b16 %v927, %v927
          %v960 = vpack.c.b16 %v928, %v928
          %v961 = vpack.c.b16 %v929, %v929
          %v962 = vpack.c.b16 %v930, %v930
          %995 = vst [vmem:[%s213] sm:$0xf] %v931
          %996 = vst [vmem:[%s213 + $0x4] sm:$0xf] %v932
          %997 = vst [vmem:[%s213 + $0x8] sm:$0xf] %v933
          %998 = vst [vmem:[%s213 + $0xc] sm:$0xf] %v934
          %999 = vst [vmem:[%s213 + $0x10] sm:$0xf] %v935
          %1000 = vst [vmem:[%s213 + $0x14] sm:$0xf] %v936
          %1001 = vst [vmem:[%s213 + $0x18] sm:$0xf] %v937
          %1002 = vst [vmem:[%s213 + $0x1c] sm:$0xf] %v938
          %1003 = vst [vmem:[%s213 + $0x20] sm:$0xf] %v939
          %1004 = vst [vmem:[%s213 + $0x24] sm:$0xf] %v940
          %1005 = vst [vmem:[%s213 + $0x28] sm:$0xf] %v941
          %1006 = vst [vmem:[%s213 + $0x2c] sm:$0xf] %v942
          %1007 = vst [vmem:[%s213 + $0x30] sm:$0xf] %v943
          %1008 = vst [vmem:[%s213 + $0x34] sm:$0xf] %v944
          %1009 = vst [vmem:[%s213 + $0x38] sm:$0xf] %v945
          %1010 = vst [vmem:[%s213 + $0x3c] sm:$0xf] %v946
          %1011 = vst [vmem:[%s213 + $0x40] sm:$0xf] %v947
          %1012 = vst [vmem:[%s213 + $0x44] sm:$0xf] %v948
          %1013 = vst [vmem:[%s213 + $0x48] sm:$0xf] %v949
          %1014 = vst [vmem:[%s213 + $0x4c] sm:$0xf] %v950
          %1015 = vst [vmem:[%s213 + $0x50] sm:$0xf] %v951
          %1016 = vst [vmem:[%s213 + $0x54] sm:$0xf] %v952
          %1017 = vst [vmem:[%s213 + $0x58] sm:$0xf] %v953
          %1018 = vst [vmem:[%s213 + $0x5c] sm:$0xf] %v954
          %1019 = vst [vmem:[%s213 + $0x60] sm:$0xf] %v955
          %1020 = vst [vmem:[%s213 + $0x64] sm:$0xf] %v956
          %1021 = vst [vmem:[%s213 + $0x68] sm:$0xf] %v957
          %1022 = vst [vmem:[%s213 + $0x6c] sm:$0xf] %v958
          %1023 = vst [vmem:[%s213 + $0x70] sm:$0xf] %v959
          %1024 = vst [vmem:[%s213 + $0x74] sm:$0xf] %v960
          %1025 = vst [vmem:[%s213 + $0x78] sm:$0xf] %v961
          %1026 = vst [vmem:[%s213 + $0x7c] sm:$0xf] %v962
        $region44: #{tpu_custom_call.1} parent=27 // pred_fallthru
          _
        %s1027 = sand.u32 %s105, 1
        %s1028 = scalar_lea.sflag [#allocation5], %s1027
        %s1029 = sand.u32 %s105, 1
        %s1030 = smul.addr %s1029, 128
        %s1031 = scalar_lea.vmem [#allocation8], %s1030
        // Predicated region
        $region45: #{tpu_custom_call.1} parent=27 // pred_check
          %p1032 = pneg %p115
        $region46: #{tpu_custom_call.1} parent=27 // pred_check_branch
          %1034 = sbr.rel (%p1032) target = $region48
        $region47: #{tpu_custom_call.1} parent=27 // pred_region
          %s1035 = smul.u32 32, %s25
          %s1037 = ssub.s32 2048, 2048
          %1038 = vsyncadd %s1028, %s1037
          %s1039 = sadd.s32 %s26, %s1035
          %s1040 = smul.addr %s1039, 64
          %s1041 = scalar_lea.hbm %s2, %s1040
          %s1042 = sshll.u32 %s1031, 4
          %s1043 = int_to_ptr.vmem [resolvable:$true] %s1042
          %1048 = dma.vmem_to_hbm [thread:$0]  %s1043, 2048, %s1041, %s1028, 64, 64, 4
        $region48: #{tpu_custom_call.1} parent=27 // pred_fallthru
          _
      $region28: #{tpu_custom_call.1} parent=5 // pred_fallthru
        _
      %p1049 = scmp.le.s32.totalorder 2, %s15
      // Predicated region
      $region49: #{tpu_custom_call.1} parent=5 // pred_check
        %p1050 = pneg %p1049
      $region50: #{tpu_custom_call.1} parent=5 // pred_check_branch
        %1052 = sbr.rel (%p1050) target = $region52
      $region51: #{tpu_custom_call.1} parent=5 // pred_region
        %s1053 = ssub.s32 %s15, 2
        // Predicated region
        $region53: #{tpu_custom_call.1} parent=51 // pred_check
          %p1054 = pneg %p121
        $region54: #{tpu_custom_call.1} parent=51 // pred_check_branch
          %1056 = sbr.rel (%p1054) target = $region56
        $region55: #{tpu_custom_call.1} parent=51 // pred_region
          %s1057 = sand.u32 %s106, 1
          %s1058 = scalar_lea.sflag [#allocation5], %s1057
          %s1059 = sand.u32 %s106, 1
          %s1060 = smul.addr %s1059, 128
          %s1061 = scalar_lea.vmem [#allocation8], %s1060
          %1062 = dma.done %s1058, 2048
        $region56: #{tpu_custom_call.1} parent=51 // pred_fallthru
          _
      $region52: #{tpu_custom_call.1} parent=5 // pred_fallthru
        _
    $region6: #{tpu_custom_call.1} parent=1 // loop_footer
      %s19 = sadd.s32 1, %s15
    $region7: #{tpu_custom_call.1} parent=1 // loop_footer_branch
      %14 = sbr.rel target = $region3
    $region8: #{tpu_custom_call.1} parent=1 // loop_exit
      _
    %1063 = vsyncpa [#allocation4], 1
    %s1064 = scalar_lea.sflag [#allocation4], 1
    %1065 = vsyncpa %s1064, 1
    %1066 = vsyncpa [#allocation7], 1
    %1067 = vsyncpa [#allocation5], 1
    %s1068 = scalar_lea.sflag [#allocation5], 1
    %1069 = vsyncpa %s1068, 1

</llo_original>
